<compile_context>
chip_gen: v6e
topology: v6e:2x2x1
jax: 0.10.0
libtpu: 0.0.40
codegen_flags: <defaults>
</compile_context>

<pallas_src>
import jax
import jax.numpy as jnp
from jax.experimental import pallas as pl
from jax.experimental.pallas import tpu as pltpu


def score_kernel(x_ref, w1_ref, b1_ref, w2_ref, b2_ref, wo_ref, bo_ref, o_ref):
    # Layer 1: tanh(W1 @ x_t + b1)   -> [H, tb]   (MXU + VPU add + EUP tanh)
    h = jnp.tanh(
        jnp.dot(w1_ref[...], x_ref[...], preferred_element_type=jnp.float32)
        + b1_ref[...]
    )
    # Dropout(p=0.8) -> identity (eval mode).
    # Layer 2: tanh(W2 @ h + b2)     -> [H, tb]
    h = jnp.tanh(
        jnp.dot(w2_ref[...], h.astype(w2_ref.dtype),
                preferred_element_type=jnp.float32)
        + b2_ref[...]
    )
    # Output head: no N=1 MXU matmul.  VPU broadcast-mul with the wo column
    # ([H,1]) and an XLU sublane reduction give a lane-dense [1, tb] row.
    o_ref[...] = (
        jnp.sum(h * wo_ref[...], axis=0, keepdims=True) + bo_ref[0, 0]
    )


def score_module_forward(x, w1, b1, w2, b2, wo, bo, *, tb=None,
                         compute_dtype=jnp.float32):
    """Forward pass.

    x : [B, H] float32
    w1, w2 : [H, H] in PyTorch [out, in] layout
    b1, b2 : [H], wo : [H] (o.weight[0]), bo : scalar
    Returns [B, 1] float32.
    """
    B, H = x.shape
    if tb is None:
        tb = B
    # Lane-dense constraint: batch tile must be the full batch or a multiple of 128.
    assert tb == B or tb % 128 == 0, "tb must equal B or be a multiple of 128"
    grid = (pl.cdiv(B, tb),)

    # Wrapper-side layout plumbing (batch on the lane axis).
    x_t = x.T.astype(compute_dtype)                      # [H, B]
    w1c = w1.astype(compute_dtype)                       # [H, H]
    w2c = w2.astype(compute_dtype)                       # [H, H]
    b1c = b1.reshape(H, 1).astype(jnp.float32)           # [H, 1]
    b2c = b2.reshape(H, 1).astype(jnp.float32)           # [H, 1]
    woc = wo.reshape(H, 1).astype(jnp.float32)           # [H, 1]
    boc = bo.reshape(1, 1).astype(jnp.float32)           # SMEM scalar

    out_t = pl.pallas_call(
        score_kernel,
        out_shape=jax.ShapeDtypeStruct((1, B), jnp.float32),
        grid_spec=pltpu.PrefetchScalarGridSpec(
            num_scalar_prefetch=0,
            grid=grid,
            in_specs=[
                pl.BlockSpec((H, tb), lambda i: (0, i)),   # x_t tile (batch on lanes)
                pl.BlockSpec((H, H), lambda i: (0, 0)),    # W1 (grid-invariant)
                pl.BlockSpec((H, 1), lambda i: (0, 0)),    # b1
                pl.BlockSpec((H, H), lambda i: (0, 0)),    # W2 (grid-invariant)
                pl.BlockSpec((H, 1), lambda i: (0, 0)),    # b2
                pl.BlockSpec((H, 1), lambda i: (0, 0)),    # wo (head mul+reduce)
                pl.BlockSpec(memory_space=pltpu.MemorySpace.SMEM),  # bo scalar
            ],
            out_specs=pl.BlockSpec((1, tb), lambda i: (0, i)),  # lane-dense row
        ),
        compiler_params=pltpu.CompilerParams(
            dimension_semantics=("parallel",),   # batch tiles shard across TCs on v7x
            vmem_limit_bytes=32 * 1024 * 1024,
        ),
    )(x_t, w1c, b1c, w2c, b2c, woc, boc)

    return out_t.T   # [B, 1]


def init_params(key, dim_h):
    """Matches the module init: weight ~ N(0, 0.02), bias ~ N(0, 1); PyTorch [out,in] layout."""
    k = jax.random.split(key, 6)
    w1 = 0.02 * jax.random.normal(k[0], (dim_h, dim_h), jnp.float32)
    b1 = jax.random.normal(k[1], (dim_h,), jnp.float32)
    w2 = 0.02 * jax.random.normal(k[2], (dim_h, dim_h), jnp.float32)
    b2 = jax.random.normal(k[3], (dim_h,), jnp.float32)
    wo = 0.02 * jax.random.normal(k[4], (dim_h,), jnp.float32)
    bo = jax.random.normal(k[5], (), jnp.float32)
    return w1, b1, w2, b2, wo, bo


def reference_forward(x, w1, b1, w2, b2, wo, bo, compute_dtype=jnp.float32):
    cd = compute_dtype
    h = jnp.tanh(
        jnp.dot(x.astype(cd), w1.astype(cd).T,
                preferred_element_type=jnp.float32) + b1[None, :])
    h = jnp.tanh(
        jnp.dot(h.astype(cd), w2.astype(cd).T,
                preferred_element_type=jnp.float32) + b2[None, :])
    return jnp.dot(h, wo[:, None]) + bo


if __name__ == "__main__":
    key = jax.random.PRNGKey(0)
    kx, kp, kx2 = jax.random.split(key, 3)

    # Small, module-consistent shapes (batch=8, dim_h=32): exact f32 check.
    B, H = 8, 32
    x = jax.random.normal(kx, (B, H), jnp.float32)
    params = init_params(kp, H)

    out = jax.block_until_ready(score_module_forward(x, *params))
    ref = reference_forward(x, *params)
    assert out.shape == (B, 1), out.shape
    assert jnp.allclose(out, ref, atol=1e-5, rtol=1e-5), (out, ref)

    # Larger batch: tiled grid (>1 step, so v7x's two TCs both work) + bf16 matmuls.
    B2 = 1024
    x2 = jax.random.normal(kx2, (B2, H), jnp.float32)
    out2 = jax.block_until_ready(
        score_module_forward(x2, *params, tb=256, compute_dtype=jnp.bfloat16))
    ref2 = reference_forward(x2, *params, compute_dtype=jnp.bfloat16)
    assert out2.shape == (B2, 1), out2.shape
    assert jnp.allclose(out2, ref2, atol=3e-2, rtol=3e-2)

    print("KERNEL_OK")
</pallas_src>

<mosaic_0001>
module attributes {stable_mosaic.version = 11 : i64} {
  func.func @score_kernel(%arg0: i32, %arg1: memref<32x8xf32, #tpu.memory_space<vmem>>, %arg2: memref<32x32xf32, #tpu.memory_space<vmem>>, %arg3: memref<32x1xf32, #tpu.memory_space<vmem>>, %arg4: memref<32x32xf32, #tpu.memory_space<vmem>>, %arg5: memref<32x1xf32, #tpu.memory_space<vmem>>, %arg6: memref<32x1xf32, #tpu.memory_space<vmem>>, %arg7: memref<1x1xf32, #tpu.memory_space<smem>>, %arg8: memref<1x8xf32, #tpu.memory_space<vmem>>) attributes {dimension_semantics = [#tpu.dimension_semantics<parallel>], iteration_bounds = array<i64: 1>, scalar_prefetch = 0 : i64, scratch_operands = 0 : i64, tpu.core_type = #tpu.core_type<tc>, window_params = [{transform_indices = @transform_0, window_bounds = array<i64: 32, 8>}, {pipeline_mode = #tpu.pipeline_mode<synchronous>, transform_indices = @transform_1, window_bounds = array<i64: 32, 32>}, {pipeline_mode = #tpu.pipeline_mode<synchronous>, transform_indices = @transform_2, window_bounds = array<i64: 32, 1>}, {pipeline_mode = #tpu.pipeline_mode<synchronous>, transform_indices = @transform_3, window_bounds = array<i64: 32, 32>}, {pipeline_mode = #tpu.pipeline_mode<synchronous>, transform_indices = @transform_4, window_bounds = array<i64: 32, 1>}, {pipeline_mode = #tpu.pipeline_mode<synchronous>, transform_indices = @transform_5, window_bounds = array<i64: 32, 1>}, {transform_indices = @transform_6, window_bounds = array<i64: 1, 1>}, {transform_indices = @transform_7, window_bounds = array<i64: 1, 8>}]} {
    %c0 = arith.constant 0 : index
    %c0_0 = arith.constant 0 : index
    %0 = vector.load %arg2[%c0, %c0_0] : memref<32x32xf32, #tpu.memory_space<vmem>>, vector<32x32xf32>
    %c0_1 = arith.constant 0 : index
    %c0_2 = arith.constant 0 : index
    %1 = vector.load %arg1[%c0_1, %c0_2] : memref<32x8xf32, #tpu.memory_space<vmem>>, vector<32x8xf32>
    %cst = arith.constant dense<0.000000e+00> : vector<32x8xf32>
    %2 = tpu.matmul %0, %1, %cst {dimension_numbers = #tpu.dot_dimension_numbers<[1], [0], [0], [1], [0, 0, 1, 1], [], []>} : vector<32x32xf32>, vector<32x8xf32>, vector<32x8xf32> -> vector<32x8xf32>
    %c0_3 = arith.constant 0 : index
    %c0_4 = arith.constant 0 : index
    %3 = vector.load %arg3[%c0_3, %c0_4] : memref<32x1xf32, #tpu.memory_space<vmem>>, vector<32x1xf32>
    %4 = vector.broadcast %3 : vector<32x1xf32> to vector<32x8xf32>
    %5 = arith.addf %2, %4 : vector<32x8xf32>
    %6 = math.tanh %5 : vector<32x8xf32>
    %c0_5 = arith.constant 0 : index
    %c0_6 = arith.constant 0 : index
    %7 = vector.load %arg4[%c0_5, %c0_6] : memref<32x32xf32, #tpu.memory_space<vmem>>, vector<32x32xf32>
    %cst_7 = arith.constant dense<0.000000e+00> : vector<32x8xf32>
    %8 = tpu.matmul %7, %6, %cst_7 {dimension_numbers = #tpu.dot_dimension_numbers<[1], [0], [0], [1], [0, 0, 1, 1], [], []>} : vector<32x32xf32>, vector<32x8xf32>, vector<32x8xf32> -> vector<32x8xf32>
    %c0_8 = arith.constant 0 : index
    %c0_9 = arith.constant 0 : index
    %9 = vector.load %arg5[%c0_8, %c0_9] : memref<32x1xf32, #tpu.memory_space<vmem>>, vector<32x1xf32>
    %10 = vector.broadcast %9 : vector<32x1xf32> to vector<32x8xf32>
    %11 = arith.addf %8, %10 : vector<32x8xf32>
    %12 = math.tanh %11 : vector<32x8xf32>
    %c0_10 = arith.constant 0 : index
    %c0_11 = arith.constant 0 : index
    %13 = vector.load %arg6[%c0_10, %c0_11] : memref<32x1xf32, #tpu.memory_space<vmem>>, vector<32x1xf32>
    %14 = vector.broadcast %13 : vector<32x1xf32> to vector<32x8xf32>
    %15 = arith.mulf %12, %14 : vector<32x8xf32>
    %cst_12 = arith.constant dense<0.000000e+00> : vector<8xf32>
    %16 = vector.multi_reduction <add>, %15, %cst_12 [0] : vector<32x8xf32> to vector<8xf32>
    %17 = vector.shape_cast %16 : vector<8xf32> to vector<1x8xf32>
    %c0_13 = arith.constant 0 : index
    %c0_14 = arith.constant 0 : index
    %18 = memref.load %arg7[%c0_13, %c0_14] : memref<1x1xf32, #tpu.memory_space<smem>>
    %19 = vector.broadcast %18 : f32 to vector<1x8xf32>
    %20 = arith.addf %17, %19 : vector<1x8xf32>
    %c0_15 = arith.constant 0 : index
    %c0_16 = arith.constant 0 : index
    %21 = vector.load %arg8[%c0_15, %c0_16] : memref<1x8xf32, #tpu.memory_space<vmem>>, vector<1x8xf32>
    tpu.vector_store %arg8[%c0_15, %c0_16], %20 {strides = array<i32>} : memref<1x8xf32, #tpu.memory_space<vmem>>, vector<1x8xf32>,
    return
  }
  func.func @transform_0(%arg0: i32) -> (i32, i32) {
    %c0_i32 = arith.constant 0 : i32
    %c0_i32_0 = arith.constant 0 : i32
    return %c0_i32, %arg0 : i32, i32
  }
  func.func @transform_1(%arg0: i32) -> (i32, i32) {
    %c0_i32 = arith.constant 0 : i32
    %c0_i32_0 = arith.constant 0 : i32
    %c0_i32_1 = arith.constant 0 : i32
    return %c0_i32, %c0_i32_0 : i32, i32
  }
  func.func @transform_2(%arg0: i32) -> (i32, i32) {
    %c0_i32 = arith.constant 0 : i32
    %c0_i32_0 = arith.constant 0 : i32
    %c0_i32_1 = arith.constant 0 : i32
    return %c0_i32, %c0_i32_0 : i32, i32
  }
  func.func @transform_3(%arg0: i32) -> (i32, i32) {
    %c0_i32 = arith.constant 0 : i32
    %c0_i32_0 = arith.constant 0 : i32
    %c0_i32_1 = arith.constant 0 : i32
    return %c0_i32, %c0_i32_0 : i32, i32
  }
  func.func @transform_4(%arg0: i32) -> (i32, i32) {
    %c0_i32 = arith.constant 0 : i32
    %c0_i32_0 = arith.constant 0 : i32
    %c0_i32_1 = arith.constant 0 : i32
    return %c0_i32, %c0_i32_0 : i32, i32
  }
  func.func @transform_5(%arg0: i32) -> (i32, i32) {
    %c0_i32 = arith.constant 0 : i32
    %c0_i32_0 = arith.constant 0 : i32
    %c0_i32_1 = arith.constant 0 : i32
    return %c0_i32, %c0_i32_0 : i32, i32
  }
  func.func @transform_6(%arg0: i32) -> (i32, i32) {
    %c0_i32 = arith.constant 0 : i32
    %c0_i32_0 = arith.constant 0 : i32
    %c0_i32_1 = arith.constant 0 : i32
    return %c0_i32, %c0_i32_0 : i32, i32
  }
  func.func @transform_7(%arg0: i32) -> (i32, i32) {
    %c0_i32 = arith.constant 0 : i32
    %c0_i32_0 = arith.constant 0 : i32
    return %c0_i32, %arg0 : i32, i32
  }
}

</mosaic_0001>

<llo_original>
// kernel: tpu_custom_call.1
$region0: #{tpu_custom_call.1}
  #allocation0 [shape = 'u32[]', space=smem, size = 0x4, offset = 0x4, fixed_abs, tag = 'smem constant byte address 0x4 - core index']
  #allocation1 [shape = 'u32[144,128]{1,0:T(1,128)}', space=vmem, size = 0x12000, scoped, tag = 'internal scratch']
  #allocation2 [shape = 'f32[1,1]{1,0:T(1,128)S(6)}', space=smem, size = 0x200, scoped, tag = 'scoped memory for tpu_custom_call.1']
  %s0 = inlined_call_operand.vmem [shape: f32[32,8], index: 0, kind: input, shape index: {}]
  %s1 = inlined_call_operand.vmem [shape: f32[32,32], index: 1, kind: input, shape index: {}]
  %s2 = inlined_call_operand.vmem [shape: f32[32,1], index: 2, kind: input, shape index: {}]
  %s3 = inlined_call_operand.vmem [shape: f32[32,32], index: 3, kind: input, shape index: {}]
  %s4 = inlined_call_operand.vmem [shape: f32[32,1], index: 4, kind: input, shape index: {}]
  %s5 = inlined_call_operand.vmem [shape: f32[32,1], index: 5, kind: input, shape index: {}]
  %s6 = inlined_call_operand.<no memory space> [shape: f32[1,1], index: 6, kind: input, shape index: {}]
  %s7 = inlined_call_operand.hbm [shape: f32[1,8], index: 7, kind: output, shape index: {}]
  %s8 = sld [smem:[#allocation0]]
  $region38: #{tpu_custom_call.1} parent=0
    _
  %s10 = ssub.s32 1, %s8
  %s11 = scalar_select 0, %s10, %s8
  %12 = sst [smem:[#allocation2]] %s6
  $region1: #{tpu_custom_call.1} parent=0
    #allocation3 [shape = 'u8[512]{0}', space=vmem, size = 0x400, scoped, tag = 'output window, operand 0, single buffered']
    #allocation4 [shape = 's32[1]{0}', space=sflag, size = 0x4, scoped, tag = 'scoped memory for tpu_custom_call.1']
    %13 = vsyncpa [#allocation4], 0
    // Predicated region
    $region2: #{tpu_custom_call.1} parent=1 // pred_check
      _
    $region3: #{tpu_custom_call.1} parent=1 // pred_check_branch
      %15 = sbr.rel (0) target = $region5
    $region4: #{tpu_custom_call.1} parent=1 // pred_region
      _
    $region5: #{tpu_custom_call.1} parent=1 // pred_fallthru
      _
    // Predicated region
    $region6: #{tpu_custom_call.1} parent=1 // pred_check
      _
    $region7: #{tpu_custom_call.1} parent=1 // pred_check_branch
      %17 = sbr.rel (0) target = $region9
    $region8: #{tpu_custom_call.1} parent=1 // pred_region
      _
    $region9: #{tpu_custom_call.1} parent=1 // pred_fallthru
      _
    // Predicated region
    $region10: #{tpu_custom_call.1} parent=1 // pred_check
      _
    $region11: #{tpu_custom_call.1} parent=1 // pred_check_branch
      %19 = sbr.rel (0) target = $region13
    $region12: #{tpu_custom_call.1} parent=1 // pred_region
      _
    $region13: #{tpu_custom_call.1} parent=1 // pred_fallthru
      _
    // Predicated region
    $region14: #{tpu_custom_call.1} parent=1 // pred_check
      _
    $region15: #{tpu_custom_call.1} parent=1 // pred_check_branch
      %21 = sbr.rel (0) target = $region17
    $region16: #{tpu_custom_call.1} parent=1 // pred_region
      _
    $region17: #{tpu_custom_call.1} parent=1 // pred_fallthru
      _
    // Predicated region
    $region18: #{tpu_custom_call.1} parent=1 // pred_check
      _
    $region19: #{tpu_custom_call.1} parent=1 // pred_check_branch
      %23 = sbr.rel (0) target = $region21
    $region20: #{tpu_custom_call.1} parent=1 // pred_region
      _
    $region21: #{tpu_custom_call.1} parent=1 // pred_fallthru
      _
    // Predicated region
    $region22: #{tpu_custom_call.1} parent=1 // pred_check
      _
    $region23: #{tpu_custom_call.1} parent=1 // pred_check_branch
      %25 = sbr.rel (0) target = $region25
    $region24: #{tpu_custom_call.1} parent=1 // pred_region
      _
    $region25: #{tpu_custom_call.1} parent=1 // pred_fallthru
      _
    // Predicated region
    $region26: #{tpu_custom_call.1} parent=1 // pred_check
      _
    $region27: #{tpu_custom_call.1} parent=1 // pred_check_branch
      %27 = sbr.rel (0) target = $region29
    $region28: #{tpu_custom_call.1} parent=1 // pred_region
      _
    $region29: #{tpu_custom_call.1} parent=1 // pred_fallthru
      _
    %v28 = vld [vmem:[%s1] sm:$0xff]
    %v29 = vld [vmem:[%s1 + $0x8] sm:$0xff]
    %v30 = vld [vmem:[%s1 + $0x10] sm:$0xff]
    %v31 = vld [vmem:[%s1 + $0x18] sm:$0xff]
    %v32 = vld [vmem:[%s0] sm:$0xff]
    %v33 = vld [vmem:[%s0 + $0x8] sm:$0xff]
    %v34 = vld [vmem:[%s0 + $0x10] sm:$0xff]
    %v35 = vld [vmem:[%s0 + $0x18] sm:$0xff]
    %v36 = vld [vmem:[%s2] sm:$0xff]
    %v37 = vld [vmem:[%s2 + $0x8] sm:$0xff]
    %v38 = vld [vmem:[%s2 + $0x10] sm:$0xff]
    %v39 = vld [vmem:[%s2 + $0x18] sm:$0xff]
    %41 = vset.pattern.permute.xlu0 0
    %42 = vperm.xlu0 %41, %v36
    %v43 = vpop.permute.xlu0 %42
    %46 = vset.pattern.permute.xlu0 0
    %47 = vperm.xlu0 %46, %v37
    %v48 = vpop.permute.xlu0 %47
    %51 = vset.pattern.permute.xlu0 0
    %52 = vperm.xlu0 %51, %v38
    %v53 = vpop.permute.xlu0 %52
    %56 = vset.pattern.permute.xlu0 0
    %57 = vperm.xlu0 %56, %v39
    %v58 = vpop.permute.xlu0 %57
    %vm60 = vcmask 261120
    %v62 = vsel %vm60, %v28, 0
    %v65 = vsel %vm60, %v29, 0
    %v68 = vsel %vm60, %v30, 0
    %v71 = vsel %vm60, %v31, 0
    %73 = vmatprep.subr.mxu0 0.0
    %74 = vmatpush1.msra.mxu0 0.0
    %75 = vmatprep.subr.mxu0 0.0
    %76 = vmatpush1.msra.mxu0 0.0
    %77 = vmatprep.subr.mxu0 0.0
    %78 = vmatpush1.msra.mxu0 0.0
    %79 = vmatprep.subr.mxu0 0.0
    %80 = vmatpush1.msra.mxu0 0.0
    %81 = vmatprep.subr.mxu0 0.0
    %82 = vmatpush1.msra.mxu0 0.0
    %83 = vmatprep.subr.mxu0 0.0
    %84 = vmatpush1.msra.mxu0 0.0
    %85 = vmatprep.subr.mxu0 0.0
    %86 = vmatpush1.msra.mxu0 0.0
    %87 = vmatprep.subr.mxu0 0.0
    %88 = vmatpush1.msra.mxu0 0.0
    %89 = vmatprep.subr.mxu0 0.0
    %90 = vmatpush1.msra.mxu0 0.0
    %91 = vmatprep.subr.mxu0 0.0
    %92 = vmatpush1.msra.mxu0 0.0
    %93 = vmatprep.subr.mxu0 0.0
    %94 = vmatpush1.msra.mxu0 0.0
    %95 = vmatprep.subr.mxu0 0.0
    %96 = vmatpush1.msra.mxu0 0.0
    %97 = vmatprep.subr.mxu0 0.0
    %98 = vmatpush1.msra.mxu0 %v35
    %99 = vmatprep.subr.mxu0 0.0
    %100 = vmatpush1.msra.mxu0 %v34
    %101 = vmatprep.subr.mxu0 0.0
    %102 = vmatpush1.msra.mxu0 %v33
    %103 = vmatprep.subr.mxu0 0.0
    %104 = vmatpush1.msra.mxu0 %v32
    %105 = vmatprep.subr.mxu0 0.0
    %106 = vmatpush2.msra.mxu0 0.0
    %107 = vmatprep.subr.mxu0 0.0
    %108 = vmatpush2.msra.mxu0 0.0
    %109 = vmatprep.subr.mxu0 0.0
    %110 = vmatpush2.msra.mxu0 0.0
    %111 = vmatprep.subr.mxu0 0.0
    %112 = vmatpush2.msra.mxu0 0.0
    %113 = vmatprep.subr.mxu0 0.0
    %114 = vmatpush2.msra.mxu0 0.0
    %115 = vmatprep.subr.mxu0 0.0
    %116 = vmatpush2.msra.mxu0 0.0
    %117 = vmatprep.subr.mxu0 0.0
    %118 = vmatpush2.msra.mxu0 0.0
    %119 = vmatprep.subr.mxu0 0.0
    %120 = vmatpush2.msra.mxu0 0.0
    %121 = vmatprep.subr.mxu0 0.0
    %122 = vmatpush2.msra.mxu0 0.0
    %123 = vmatprep.subr.mxu0 0.0
    %124 = vmatpush2.msra.mxu0 0.0
    %125 = vmatprep.subr.mxu0 0.0
    %126 = vmatpush2.msra.mxu0 0.0
    %127 = vmatprep.subr.mxu0 0.0
    %128 = vmatpush2.msra.mxu0 0.0
    %129 = vmatprep.subr.mxu0 0.0
    %130 = vmatpush2.msra.mxu0 0.0
    %131 = vmatprep.subr.mxu0 0.0
    %132 = vmatpush2.msra.mxu0 0.0
    %133 = vmatprep.subr.mxu0 0.0
    %134 = vmatpush2.msra.mxu0 0.0
    %135 = vmatprep.subr.mxu0 0.0
    %136 = vmatpush2.msra.mxu0 0.0
    %137 = vmatprep.mubr.f32.mxu0 0.0
    %138 = vmatmul.mubr.f32.gmra.mxu0 %v62
    %v139 = vpop.f32.mrf.mxu0
    %v140 = vadd.f32 %v43, %v139
    %v141 = vpop.f32.mrf.mxu0
    %142 = vmatprep.mubr.f32.mxu0 0.0
    %143 = vmatmul.mubr.f32.gmra.mxu0 %v65
    %v144 = vpop.f32.mrf.mxu0
    %v145 = vadd.f32 %v48, %v144
    %v146 = vpop.f32.mrf.mxu0
    %147 = vmatprep.mubr.f32.mxu0 0.0
    %148 = vmatmul.mubr.f32.gmra.mxu0 %v68
    %v149 = vpop.f32.mrf.mxu0
    %v150 = vadd.f32 %v53, %v149
    %v151 = vpop.f32.mrf.mxu0
    %152 = vmatprep.mubr.f32.mxu0 0.0
    %153 = vmatmul.mubr.f32.gmra.mxu0 %v71
    %v154 = vpop.f32.mrf.mxu0
    %v155 = vadd.f32 %v58, %v154
    %v156 = vpop.f32.mrf.mxu0
    %157 = vdwg.mxu0
    %v158 = vtanh.pop %v140
    %v159 = vtanh.pop %v145
    %v160 = vtanh.pop %v150
    %v161 = vtanh.pop %v155
    %v162 = vld [vmem:[%s3] sm:$0xff]
    %v163 = vld [vmem:[%s3 + $0x8] sm:$0xff]
    %v164 = vld [vmem:[%s3 + $0x10] sm:$0xff]
    %v165 = vld [vmem:[%s3 + $0x18] sm:$0xff]
    %v166 = vld [vmem:[%s4] sm:$0xff]
    %v167 = vld [vmem:[%s4 + $0x8] sm:$0xff]
    %v168 = vld [vmem:[%s4 + $0x10] sm:$0xff]
    %v169 = vld [vmem:[%s4 + $0x18] sm:$0xff]
    %171 = vset.pattern.permute.xlu0 0
    %172 = vperm.xlu0 %171, %v166
    %v173 = vpop.permute.xlu0 %172
    %176 = vset.pattern.permute.xlu0 0
    %177 = vperm.xlu0 %176, %v167
    %v178 = vpop.permute.xlu0 %177
    %181 = vset.pattern.permute.xlu0 0
    %182 = vperm.xlu0 %181, %v168
    %v183 = vpop.permute.xlu0 %182
    %186 = vset.pattern.permute.xlu0 0
    %187 = vperm.xlu0 %186, %v169
    %v188 = vpop.permute.xlu0 %187
    %v191 = vsel %vm60, %v162, 0
    %v194 = vsel %vm60, %v163, 0
    %v197 = vsel %vm60, %v164, 0
    %v200 = vsel %vm60, %v165, 0
    %202 = vmatprep.subr.mxu0 0.0
    %203 = vmatpush1.msra.mxu0 0.0
    %204 = vmatprep.subr.mxu0 0.0
    %205 = vmatpush1.msra.mxu0 0.0
    %206 = vmatprep.subr.mxu0 0.0
    %207 = vmatpush1.msra.mxu0 0.0
    %208 = vmatprep.subr.mxu0 0.0
    %209 = vmatpush1.msra.mxu0 0.0
    %210 = vmatprep.subr.mxu0 0.0
    %211 = vmatpush1.msra.mxu0 0.0
    %212 = vmatprep.subr.mxu0 0.0
    %213 = vmatpush1.msra.mxu0 0.0
    %214 = vmatprep.subr.mxu0 0.0
    %215 = vmatpush1.msra.mxu0 0.0
    %216 = vmatprep.subr.mxu0 0.0
    %217 = vmatpush1.msra.mxu0 0.0
    %218 = vmatprep.subr.mxu0 0.0
    %219 = vmatpush1.msra.mxu0 0.0
    %220 = vmatprep.subr.mxu0 0.0
    %221 = vmatpush1.msra.mxu0 0.0
    %222 = vmatprep.subr.mxu0 0.0
    %223 = vmatpush1.msra.mxu0 0.0
    %224 = vmatprep.subr.mxu0 0.0
    %225 = vmatpush1.msra.mxu0 0.0
    %226 = vmatprep.subr.mxu0 0.0
    %227 = vmatpush1.msra.mxu0 %v161
    %228 = vmatprep.subr.mxu0 0.0
    %229 = vmatpush1.msra.mxu0 %v160
    %230 = vmatprep.subr.mxu0 0.0
    %231 = vmatpush1.msra.mxu0 %v159
    %232 = vmatprep.subr.mxu0 0.0
    %233 = vmatpush1.msra.mxu0 %v158
    %234 = vmatprep.subr.mxu0 0.0
    %235 = vmatpush2.msra.mxu0 0.0
    %236 = vmatprep.subr.mxu0 0.0
    %237 = vmatpush2.msra.mxu0 0.0
    %238 = vmatprep.subr.mxu0 0.0
    %239 = vmatpush2.msra.mxu0 0.0
    %240 = vmatprep.subr.mxu0 0.0
    %241 = vmatpush2.msra.mxu0 0.0
    %242 = vmatprep.subr.mxu0 0.0
    %243 = vmatpush2.msra.mxu0 0.0
    %244 = vmatprep.subr.mxu0 0.0
    %245 = vmatpush2.msra.mxu0 0.0
    %246 = vmatprep.subr.mxu0 0.0
    %247 = vmatpush2.msra.mxu0 0.0
    %248 = vmatprep.subr.mxu0 0.0
    %249 = vmatpush2.msra.mxu0 0.0
    %250 = vmatprep.subr.mxu0 0.0
    %251 = vmatpush2.msra.mxu0 0.0
    %252 = vmatprep.subr.mxu0 0.0
    %253 = vmatpush2.msra.mxu0 0.0
    %254 = vmatprep.subr.mxu0 0.0
    %255 = vmatpush2.msra.mxu0 0.0
    %256 = vmatprep.subr.mxu0 0.0
    %257 = vmatpush2.msra.mxu0 0.0
    %258 = vmatprep.subr.mxu0 0.0
    %259 = vmatpush2.msra.mxu0 0.0
    %260 = vmatprep.subr.mxu0 0.0
    %261 = vmatpush2.msra.mxu0 0.0
    %262 = vmatprep.subr.mxu0 0.0
    %263 = vmatpush2.msra.mxu0 0.0
    %264 = vmatprep.subr.mxu0 0.0
    %265 = vmatpush2.msra.mxu0 0.0
    %266 = vmatprep.mubr.f32.mxu0 0.0
    %267 = vmatmul.mubr.f32.gmra.mxu0 %v191
    %v268 = vpop.f32.mrf.mxu0
    %v269 = vadd.f32 %v173, %v268
    %v270 = vpop.f32.mrf.mxu0
    %271 = vmatprep.mubr.f32.mxu0 0.0
    %272 = vmatmul.mubr.f32.gmra.mxu0 %v194
    %v273 = vpop.f32.mrf.mxu0
    %v274 = vadd.f32 %v178, %v273
    %v275 = vpop.f32.mrf.mxu0
    %276 = vmatprep.mubr.f32.mxu0 0.0
    %277 = vmatmul.mubr.f32.gmra.mxu0 %v197
    %v278 = vpop.f32.mrf.mxu0
    %v279 = vadd.f32 %v183, %v278
    %v280 = vpop.f32.mrf.mxu0
    %281 = vmatprep.mubr.f32.mxu0 0.0
    %282 = vmatmul.mubr.f32.gmra.mxu0 %v200
    %v283 = vpop.f32.mrf.mxu0
    %v284 = vadd.f32 %v188, %v283
    %v285 = vpop.f32.mrf.mxu0
    %286 = vdwg.mxu0
    %v287 = vtanh.pop %v269
    %v288 = vtanh.pop %v274
    %v289 = vtanh.pop %v279
    %v290 = vtanh.pop %v284
    %v291 = vld [vmem:[%s5] sm:$0xff]
    %v292 = vld [vmem:[%s5 + $0x8] sm:$0xff]
    %v293 = vld [vmem:[%s5 + $0x10] sm:$0xff]
    %v294 = vld [vmem:[%s5 + $0x18] sm:$0xff]
    %296 = vset.pattern.permute.xlu0 0
    %297 = vperm.xlu0 %296, %v291
    %v298 = vpop.permute.xlu0 %297
    %301 = vset.pattern.permute.xlu0 0
    %302 = vperm.xlu0 %301, %v292
    %v303 = vpop.permute.xlu0 %302
    %306 = vset.pattern.permute.xlu0 0
    %307 = vperm.xlu0 %306, %v293
    %v308 = vpop.permute.xlu0 %307
    %311 = vset.pattern.permute.xlu0 0
    %312 = vperm.xlu0 %311, %v294
    %v313 = vpop.permute.xlu0 %312
    %v315 = vmul.f32 %v287, %v298
    %v316 = vmul.f32 %v288, %v303
    %v317 = vmul.f32 %v289, %v308
    %v318 = vmul.f32 %v290, %v313
    %vm319 = vcmask 64512
    %v320 = vsel %vm319, %v315, 0.0
    %v321 = vsel %vm319, %v316, 0.0
    %v322 = vadd.f32 %v320, %v321
    %v323 = vsel %vm319, %v317, 0.0
    %v324 = vadd.f32 %v322, %v323
    %v325 = vsel %vm319, %v318, 0.0
    %v326 = vadd.f32 %v324, %v325
    %v327 = vrot.slane %v326, 4
    %v328 = vadd.f32 %v326, %v327
    %v329 = vrot.slane %v328, 2
    %v330 = vadd.f32 %v328, %v329
    %v331 = vrot.slane %v330, 1
    %v332 = vadd.f32 %v330, %v331
    %s333 = sld [smem:[#allocation2]]
    %v334 = vstv %s333
    %v335 = vadd.f32 %v332, %v334
    %vm336 = vcmask 57344
    %337 = vst.msk [vmem:[#allocation3] sm:$0x1] %vm336, %v335
    // Predicated region
    $region30: #{tpu_custom_call.1} parent=1 // pred_check
      _
    $region31: #{tpu_custom_call.1} parent=1 // pred_check_branch
      %339 = sbr.rel (0) target = $region33
    $region32: #{tpu_custom_call.1} parent=1 // pred_region
      %s341 = ssub.s32 16, 16
      %342 = vsyncadd [#allocation4], %s341
      %s344 = sshll.u32 [#allocation3], 4
      %s345 = int_to_ptr.vmem [resolvable:$true] %s344
      %347 = dma.vmem_to_hbm [thread:$0]  %s345, 16, %s7, [#allocation4]
    $region33: #{tpu_custom_call.1} parent=1 // pred_fallthru
      _
    // Predicated region
    $region34: #{tpu_custom_call.1} parent=1 // pred_check
      _
    $region35: #{tpu_custom_call.1} parent=1 // pred_check_branch
      %349 = sbr.rel (0) target = $region37
    $region36: #{tpu_custom_call.1} parent=1 // pred_region
      %350 = dma.done [#allocation4], 16
    $region37: #{tpu_custom_call.1} parent=1 // pred_fallthru
      _
    %351 = vsyncpa [#allocation4], 1

</llo_original>
